<compile_context>
chip_gen: v7x
topology: tpu7x:2x2x1
jax: 0.10.0
libtpu: 0.0.40
codegen_flags: <defaults>
</compile_context>

<pallas_src>
import functools
import math

import jax
import jax.numpy as jnp
from jax import lax
from jax.experimental import pallas as pl
from jax.experimental.pallas import tpu as pltpu


# ----------------------------------------------------------------------------
# Deterministic DCT-filter construction (mirrors DCTLayer.get_dct_filter)
# ----------------------------------------------------------------------------
def _build_filter_1d(POS, freq):
    pos = jnp.arange(POS, dtype=jnp.float32)
    r = jnp.cos(jnp.pi * float(freq) * (pos + 0.5) / float(POS)) / math.sqrt(POS)
    if freq != 0:
        r = r * math.sqrt(2.0)
    return r  # (POS,)


def get_dct_filter(height, width, mapper_x, mapper_y, channel):
    assert len(mapper_x) == len(mapper_y)
    assert channel % len(mapper_x) == 0
    c_part = channel // len(mapper_x)
    parts = []
    for u_x, v_y in zip(mapper_x, mapper_y):
        fx = _build_filter_1d(height, u_x)       # (H,)
        fy = _build_filter_1d(width, v_y)        # (W,)
        filt = jnp.outer(fx, fy)                 # (H, W)
        parts.append(jnp.broadcast_to(filt[None, :, :], (c_part, height, width)))
    return jnp.concatenate(parts, axis=0)        # (C, H, W)


# ----------------------------------------------------------------------------
# Tiling helpers
# ----------------------------------------------------------------------------
_C_ALIGN = 128   # C lands on the output block's lane axis -> 128-aligned when tiled


def _vmem_capacity_bytes():
    try:
        return int(pltpu.get_tpu_info().vmem_capacity_bytes)
    except Exception:
        return 64 * 1024 * 1024   # conservative default (v7x per-core VMEM)


def _choose_tiles(N, C, HW, itemsize, target_bytes, min_steps=4):
    """Pick (tn, tc) batch/channel tiles for an x block of roughly target_bytes."""
    # Channel tile: only split C when even an 8-row full-C slab doesn't fit.
    row_bytes = C * HW * itemsize
    if 8 * row_bytes <= target_bytes or C < 2 * _C_ALIGN:
        tc = C
    else:
        tc = (target_bytes // (8 * HW * itemsize) // _C_ALIGN) * _C_ALIGN
        tc = int(min(max(_C_ALIGN, tc), C))

    # Batch tile from the remaining budget (multiple of 8 -> sublane-dense blocks).
    tn = int(target_bytes // max(1, tc * HW * itemsize))
    if tn >= N:
        tn = N if (N <= 8 or N % 8 == 0) else (N // 8) * 8
    else:
        tn = min(N, max(8, (tn // 8) * 8))

    # Guarantee enough parallel grid steps for megacore (v7x) / pipeline overlap.
    def steps(tn_, tc_):
        return pl.cdiv(N, tn_) * pl.cdiv(C, tc_)

    if steps(tn, tc) < min_steps:
        if N >= 16:
            need_n = pl.cdiv(min_steps, pl.cdiv(C, tc))
            cand = max(8, (pl.cdiv(N, need_n) // 8) * 8)
            if cand < tn:
                tn = cand
        elif C >= min_steps * _C_ALIGN:
            tc = max(_C_ALIGN, (pl.cdiv(C, min_steps) // _C_ALIGN) * _C_ALIGN)
    return int(tn), int(tc)


def _pick_chunk(tn, tc, hw, limit_bytes=4 << 20):
    """Rows processed per in-kernel step so f32 temporaries stay <= ~4 MiB."""
    for c in (8, 4, 2, 1):
        if tn % c == 0 and c * tc * hw * 4 <= limit_bytes:
            return c
    return 1


# ----------------------------------------------------------------------------
# Pallas kernel: fused elementwise multiply + spatial reduction (f32 accumulate)
# ----------------------------------------------------------------------------
def _dct_kernel(x_ref, w_ref, o_ref, *, chunk, reduce_axis):
    # x_ref: (tn, tc, HW) [NCHW path] or (tn, HW, tc) [channels-last path]
    # w_ref: matching 2-D tile; o_ref: (tn, tc)
    w = w_ref[...].astype(jnp.float32)
    tn = x_ref.shape[0]
    n_chunks = tn // chunk

    def do_chunk(base):
        xv = x_ref[pl.ds(base, chunk)].astype(jnp.float32)       # (chunk, ., .)
        prod = xv * w[None]
        o_ref[pl.ds(base, chunk)] = jnp.sum(prod, axis=reduce_axis).astype(o_ref.dtype)

    if n_chunks == 1:
        do_chunk(0)
    else:
        def body(i, carry):
            do_chunk(pl.multiple_of(i * chunk, chunk))
            return carry
        lax.fori_loop(0, n_chunks, body, 0)


def dct_layer_forward(x, weight, *, channels_last=False, target_block_bytes=None):
    """x: (N, C, H, W) (default) or (N, H, W, C) if channels_last; weight: (C, H, W).

    Returns (N, C) in the promoted (float32 for bf16 activations) dtype.
    """
    assert x.ndim == 4, "x must been 4 dimensions"
    if channels_last:
        N, H, W, C = x.shape
    else:
        N, C, H, W = x.shape
    assert weight.shape == (C, H, W)
    HW = H * W
    out_dtype = jnp.promote_types(x.dtype, weight.dtype)

    # Per-generation block sizing: ~16 MiB x blocks on 128 MiB VMEM (v5e/v6e),
    # ~8 MiB on 64 MiB VMEM (v7x).
    vmem_cap = _vmem_capacity_bytes()
    if target_block_bytes is None:
        target_block_bytes = int(min(16 << 20, max(4 << 20, vmem_cap // 8)))

    itemsize = jnp.dtype(x.dtype).itemsize
    tn, tc = _choose_tiles(N, C, HW, itemsize, target_block_bytes)
    chunk = _pick_chunk(tn, tc, HW)

    if channels_last:
        # Free reshape; reduction runs over the sublane axis (no XLU lane-reduce).
        xf = x.reshape(N, HW, C)
        wf = jnp.transpose(weight.reshape(C, HW))              # (HW, C), tiny one-off
        x_spec = pl.BlockSpec((tn, HW, tc), lambda c, n: (n, 0, c))
        w_spec = pl.BlockSpec((HW, tc), lambda c, n: (0, c))
        reduce_axis = 1
    else:
        # Native NCHW layout: no extra HBM pass over x.
        xf = x.reshape(N, C, HW)
        wf = weight.reshape(C, HW)
        x_spec = pl.BlockSpec((tn, tc, HW), lambda c, n: (n, c, 0))
        w_spec = pl.BlockSpec((tc, HW), lambda c, n: (c, 0))
        reduce_axis = 2

    out_spec = pl.BlockSpec((tn, tc), lambda c, n: (n, c))
    # N iterates fastest -> the weight tile (indexed by c only) stays resident.
    grid = (pl.cdiv(C, tc), pl.cdiv(N, tn))

    # VMEM budget: double-buffered x/weight/out blocks + f32 chunk temporaries.
    # Never clamp the declared limit below the estimate.
    x_blk = tn * tc * HW * itemsize
    w_blk = tc * HW * jnp.dtype(weight.dtype).itemsize
    o_blk = tn * tc * jnp.dtype(out_dtype).itemsize
    tmp = 3 * chunk * tc * HW * 4
    vmem_est = 2 * x_blk + 2 * w_blk + 2 * o_blk + tmp + (2 << 20)
    vmem_limit = int(min(max(vmem_est, 16 << 20), vmem_cap))

    kernel = functools.partial(_dct_kernel, chunk=chunk, reduce_axis=reduce_axis)

    return pl.pallas_call(
        kernel,
        out_shape=jax.ShapeDtypeStruct((N, C), out_dtype),
        grid=grid,
        in_specs=[x_spec, w_spec],
        out_specs=out_spec,
        compiler_params=pltpu.CompilerParams(
            dimension_semantics=("parallel", "parallel"),
            vmem_limit_bytes=vmem_limit,
        ),
    )(xf, wf)


if __name__ == "__main__":
    key = jax.random.PRNGKey(0)
    k1, k2, k3 = jax.random.split(key, 3)

    # Case 1: demo shape, NCHW. batch=2, channel=4, H=W=16.
    N, C, H, W = 2, 4, 16, 16
    weight = get_dct_filter(H, W, [0, 1], [0, 1], C)                 # (C, H, W)
    x = jax.random.normal(k1, (N, C, H, W), dtype=jnp.float32)
    out = jax.block_until_ready(dct_layer_forward(x, weight))
    ref = jnp.sum(x * weight[None], axis=(2, 3))
    assert out.shape == (N, C)
    assert jnp.allclose(out, ref, atol=1e-4, rtol=1e-4), "mismatch (case 1: NCHW)"

    # Case 2: FcaNet-like shape, NCHW (C=128, 7x7 spatial).
    N2, C2, H2, W2 = 2, 128, 7, 7
    weight2 = get_dct_filter(H2, W2, [0, 1], [0, 1], C2)
    x2 = jax.random.normal(k2, (N2, C2, H2, W2), dtype=jnp.float32)
    out2 = jax.block_until_ready(dct_layer_forward(x2, weight2))
    ref2 = jnp.sum(x2 * weight2[None], axis=(2, 3))
    assert out2.shape == (N2, C2)
    assert jnp.allclose(out2, ref2, atol=1e-4, rtol=1e-4), "mismatch (case 2: NCHW)"

    # Case 3: channels-last fast path (sublane reduce, C on lanes).
    N3, C3, H3, W3 = 2, 128, 16, 16
    weight3 = get_dct_filter(H3, W3, [0, 1], [0, 1], C3)
    x3_nchw = jax.random.normal(k3, (N3, C3, H3, W3), dtype=jnp.float32)
    x3_nhwc = jnp.transpose(x3_nchw, (0, 2, 3, 1))   # harness-side: models storing NHWC pass it directly
    out3 = jax.block_until_ready(dct_layer_forward(x3_nhwc, weight3, channels_last=True))
    ref3 = jnp.sum(x3_nchw * weight3[None], axis=(2, 3))
    assert out3.shape == (N3, C3)
    assert jnp.allclose(out3, ref3, atol=1e-4, rtol=1e-4), "mismatch (case 3: NHWC)"

    # Case 4: bf16 activations, f32 accumulation in-kernel, f32 output.
    x4 = x2.astype(jnp.bfloat16)
    out4 = jax.block_until_ready(dct_layer_forward(x4, weight2))
    ref4 = jnp.sum(x4.astype(jnp.float32) * weight2[None], axis=(2, 3))
    assert out4.dtype == jnp.float32
    assert jnp.allclose(out4, ref4, atol=1e-3, rtol=1e-3), "mismatch (case 4: bf16)"

    print("KERNEL_OK")
</pallas_src>

<mosaic_0001>
module attributes {stable_mosaic.version = 11 : i64} {
  func.func @_dct_kernel(%arg0: i32, %arg1: i32, %arg2: memref<2x4x256xf32, #tpu.memory_space<vmem>>, %arg3: memref<4x256xf32, #tpu.memory_space<vmem>>, %arg4: memref<2x4xf32, #tpu.memory_space<vmem>>) attributes {dimension_semantics = [#tpu.dimension_semantics<parallel>, #tpu.dimension_semantics<parallel>], iteration_bounds = array<i64: 1, 1>, scalar_prefetch = 0 : i64, scratch_operands = 0 : i64, tpu.core_type = #tpu.core_type<tc>, window_params = [{transform_indices = @transform_0, window_bounds = array<i64: 2, 4, 256>}, {transform_indices = @transform_1, window_bounds = array<i64: 4, 256>}, {transform_indices = @transform_2, window_bounds = array<i64: 2, 4>}]} {
    %c0 = arith.constant 0 : index
    %c0_0 = arith.constant 0 : index
    %0 = vector.load %arg3[%c0, %c0_0] : memref<4x256xf32, #tpu.memory_space<vmem>>, vector<4x256xf32>
    %c0_1 = arith.constant 0 : index
    %c0_2 = arith.constant 0 : index
    %c0_3 = arith.constant 0 : index
    %1 = vector.load %arg2[%c0_1, %c0_2, %c0_3] : memref<2x4x256xf32, #tpu.memory_space<vmem>>, vector<2x4x256xf32>
    %2 = vector.shape_cast %0 : vector<4x256xf32> to vector<1x4x256xf32>
    %3 = vector.broadcast %2 : vector<1x4x256xf32> to vector<2x4x256xf32>
    %4 = arith.mulf %1, %3 : vector<2x4x256xf32>
    %cst = arith.constant dense<0.000000e+00> : vector<2x4xf32>
    %5 = vector.multi_reduction <add>, %4, %cst [2] : vector<2x4x256xf32> to vector<2x4xf32>
    %c0_4 = arith.constant 0 : index
    %c0_5 = arith.constant 0 : index
    %6 = vector.load %arg4[%c0_4, %c0_5] : memref<2x4xf32, #tpu.memory_space<vmem>>, vector<2x4xf32>
    tpu.vector_store %arg4[%c0_4, %c0_5], %5 {strides = array<i32>} : memref<2x4xf32, #tpu.memory_space<vmem>>, vector<2x4xf32>,
    return
  }
  func.func @transform_0(%arg0: i32, %arg1: i32) -> (i32, i32, i32) {
    %c0_i32 = arith.constant 0 : i32
    %c0_i32_0 = arith.constant 0 : i32
    return %arg1, %arg0, %c0_i32 : i32, i32, i32
  }
  func.func @transform_1(%arg0: i32, %arg1: i32) -> (i32, i32) {
    %c0_i32 = arith.constant 0 : i32
    %c0_i32_0 = arith.constant 0 : i32
    return %arg0, %c0_i32 : i32, i32
  }
  func.func @transform_2(%arg0: i32, %arg1: i32) -> (i32, i32) {
    %c0_i32 = arith.constant 0 : i32
    return %arg1, %arg0 : i32, i32
  }
}

</mosaic_0001>

<llo_original>
// kernel: tpu_custom_call.1
$region0: #{tpu_custom_call.1}
  #allocation0 [shape = 'u32[]', space=smem, size = 0x4, offset = 0x4, fixed_abs, tag = 'smem constant byte address 0x4 - core index']
  #allocation1 [shape = 'u32[144,128]{1,0:T(1,128)}', space=vmem, size = 0x12000, scoped, tag = 'internal scratch']
  %s0 = inlined_call_operand.hbm [shape: f32[2,4,256], index: 0, kind: input, shape index: {}]
  %s1 = inlined_call_operand.hbm [shape: f32[4,256], index: 1, kind: input, shape index: {}]
  %s2 = inlined_call_operand.hbm [shape: f32[2,4], index: 2, kind: output, shape index: {}]
  %s3 = sld [smem:[#allocation0]]
  $region26: #{tpu_custom_call.1} parent=0
    _
  %s5 = ssub.s32 1, %s3
  %s6 = scalar_select 0, %s5, %s3
  $region1: #{tpu_custom_call.1} parent=0
    #allocation2 [shape = 'u8[8192]{0}', space=vmem, size = 0x2000, scoped, tag = 'input window, operand 0, single buffered']
    #allocation3 [shape = 's32[1]{0}', space=sflag, size = 0x4, scoped, tag = 'scoped memory for tpu_custom_call.1']
    #allocation4 [shape = 's32[1]{0}', space=sflag, size = 0x4, scoped, tag = 'scoped memory for tpu_custom_call.1']
    #allocation5 [shape = 'u8[4096]{0}', space=vmem, size = 0x1000, scoped, tag = 'input window, operand 1, single buffered']
    #allocation6 [shape = 's32[1]{0}', space=sflag, size = 0x4, scoped, tag = 'scoped memory for tpu_custom_call.1']
    #allocation7 [shape = 'u8[1024]{0}', space=vmem, size = 0x400, scoped, tag = 'output window, operand 0, single buffered']
    %7 = vsyncpa [#allocation3], 0
    %8 = vsyncpa [#allocation6], 0
    %9 = vsyncpa [#allocation4], 0
    // Predicated region
    $region2: #{tpu_custom_call.1} parent=1 // pred_check
      _
    $region3: #{tpu_custom_call.1} parent=1 // pred_check_branch
      %11 = sbr.rel (0) target = $region5
    $region4: #{tpu_custom_call.1} parent=1 // pred_region
      %s13 = ssub.s32 256, 256
      %14 = vsyncadd [#allocation3], %s13
      %s15 = sshll.u32 [#allocation2], 4
      %s16 = int_to_ptr.vmem [resolvable:$true] %s15
      %21 = dma.hbm_to_vmem [thread:$0]  %s0, 256, %s16, [#allocation3], 128, 128, 8
    $region5: #{tpu_custom_call.1} parent=1 // pred_fallthru
      _
    // Predicated region
    $region6: #{tpu_custom_call.1} parent=1 // pred_check
      _
    $region7: #{tpu_custom_call.1} parent=1 // pred_check_branch
      %23 = sbr.rel (0) target = $region9
    $region8: #{tpu_custom_call.1} parent=1 // pred_region
      %s25 = ssub.s32 128, 128
      %26 = vsyncadd [#allocation6], %s25
      %s28 = sshll.u32 [#allocation5], 4
      %s29 = int_to_ptr.vmem [resolvable:$true] %s28
      %31 = dma.hbm_to_vmem [thread:$0]  %s1, 128, %s29, [#allocation6]
    $region9: #{tpu_custom_call.1} parent=1 // pred_fallthru
      _
    // Predicated region
    $region10: #{tpu_custom_call.1} parent=1 // pred_check
      _
    $region11: #{tpu_custom_call.1} parent=1 // pred_check_branch
      %33 = sbr.rel (0) target = $region13
    $region12: #{tpu_custom_call.1} parent=1 // pred_region
      %34 = dma.done [#allocation3], 256
    $region13: #{tpu_custom_call.1} parent=1 // pred_fallthru
      _
    // Predicated region
    $region14: #{tpu_custom_call.1} parent=1 // pred_check
      _
    $region15: #{tpu_custom_call.1} parent=1 // pred_check_branch
      %36 = sbr.rel (0) target = $region17
    $region16: #{tpu_custom_call.1} parent=1 // pred_region
      %37 = dma.done [#allocation6], 128
    $region17: #{tpu_custom_call.1} parent=1 // pred_fallthru
      _
    %v38 = vld [vmem:[#allocation5] sm:$0xff]
    %v39 = vld [vmem:[#allocation2] sm:$0xff]
    %v40 = vld [vmem:[#allocation2 + $0x8] sm:$0xff]
    %v41 = vmul.f32 %v39, %v38
    %v42 = vmul.f32 %v40, %v38
    %v45 = vcombine.high %v41, %v41
    %v46 = vcombine.high %v42, %v42
    %vm49 = vcmask 1043456
    %v50 = vsel %vm49, %v41, 0.0
    %v51 = vsel %vm49, %v45, 0.0
    %v52 = vadd.f32 %v50, %v51
    %53 = vadd.xlane.f32.xlu0 %v52
    %v54 = vpop.xlane.xlu0 %53
    %v55 = vsel %vm49, %v42, 0.0
    %v56 = vsel %vm49, %v46, 0.0
    %v57 = vadd.f32 %v55, %v56
    %58 = vadd.xlane.f32.xlu0 %v57
    %v59 = vpop.xlane.xlu0 %58
    %v62 = vlaneseq
    %v63 = vand.u32 %v62, 127
    %v64 = vlaneseq
    %v65 = vshrl.u32 %v64, 7
    %v66 = vsub.s32 %v63, %v65
    %v67 = vrot.slane %v54, %v66
    %v68 = vlaneseq
    %v69 = vshrl.u32 %v68, 7
    %v70 = vsub.s32 %v63, %v69
    %v71 = vrot.slane %v59, %v70
    %vm72 = vcmask 1041409
    %v73 = vsel %vm72, %v71, %v67
    %vm75 = vcmask 25600
    %76 = vst.msk [vmem:[#allocation7] sm:$0x3] %vm75, %v73
    // Predicated region
    $region18: #{tpu_custom_call.1} parent=1 // pred_check
      _
    $region19: #{tpu_custom_call.1} parent=1 // pred_check_branch
      %78 = sbr.rel (0) target = $region21
    $region20: #{tpu_custom_call.1} parent=1 // pred_region
      %s80 = ssub.s32 32, 32
      %81 = vsyncadd [#allocation4], %s80
      %s83 = sshll.u32 [#allocation7], 4
      %s84 = int_to_ptr.vmem [resolvable:$true] %s83
      %86 = dma.vmem_to_hbm [thread:$0]  %s84, 32, %s2, [#allocation4]
    $region21: #{tpu_custom_call.1} parent=1 // pred_fallthru
      _
    // Predicated region
    $region22: #{tpu_custom_call.1} parent=1 // pred_check
      _
    $region23: #{tpu_custom_call.1} parent=1 // pred_check_branch
      %88 = sbr.rel (0) target = $region25
    $region24: #{tpu_custom_call.1} parent=1 // pred_region
      %89 = dma.done [#allocation4], 32
    $region25: #{tpu_custom_call.1} parent=1 // pred_fallthru
      _
    %90 = vsyncpa [#allocation3], 1
    %91 = vsyncpa [#allocation6], 1
    %92 = vsyncpa [#allocation4], 1

</llo_original>
